<compile_context>
chip_gen: v6e
topology: v6e:2x2x1
jax: 0.10.0
libtpu: 0.0.40
codegen_flags: <defaults>
</compile_context>

<pallas_src>
import jax
import jax.numpy as jnp
from jax.experimental import pallas as pl
from jax.experimental.pallas import tpu as pltpu


def _cdiv(a, b):
    return -(-a // b)


def _round_up(x, m):
    return ((x + m - 1) // m) * m


def critic_kernel(x_ref, w1_ref, b1_ref, w2_ref, b2_ref, w3_ref, b3_ref, o_ref):
    # Layer 1: MXU matmul (bf16/f32 inputs, f32 accumulation) + VPU bias/ReLU.
    h = jnp.dot(x_ref[...], w1_ref[...], preferred_element_type=jnp.float32)
    h = jnp.maximum(h + b1_ref[...], 0.0)
    # Layer 2.
    h = jnp.dot(h.astype(w2_ref.dtype), w2_ref[...], preferred_element_type=jnp.float32)
    h = jnp.maximum(h + b2_ref[...], 0.0)
    # Output head: contract the hidden dim of h against the (8, H2) head weights
    # (row 0 = real w3, rows 1..7 zero).  Result is lane-dense (8, bt); only the
    # real row 0 is stored -> (1, bt) block, no (bt, 1) masked column store and
    # 8x less output writeback than storing the whole (8, bt) block.
    o = jnp.einsum("oh,bh->ob", w3_ref[...], h.astype(w3_ref.dtype),
                   preferred_element_type=jnp.float32)
    o_ref[...] = (o[0:1, :] + b3_ref[0, 0]).astype(o_ref.dtype)


def critic_forward(state, params, *, batch_tile=4096, compute_dtype=jnp.bfloat16):
    """Fused 3-layer MLP critic forward as a single batch-tiled Pallas kernel."""
    w1, b1, w2, b2, w3, b3 = params
    B, D = state.shape
    H1 = w1.shape[1]
    H2 = w2.shape[1]

    # Biases stay f32 (they feed the f32 accumulation path); b3 becomes an SMEM scalar.
    b1 = b1.reshape(1, H1).astype(jnp.float32)
    b2 = b2.reshape(1, H2).astype(jnp.float32)
    b3s = b3.reshape(1, 1).astype(jnp.float32)
    # Head weights as a row in compute_dtype, zero-padded to 8 sublanes so the head
    # matmul is a full (8, H2) MXU operand.
    w3_row = jnp.zeros((8, H2), compute_dtype).at[0, :].set(
        w3.reshape(H2).astype(compute_dtype))

    # Tiling: choose the tile count first (minimizes batch padding), then round the
    # tile up to a multiple of 128 so the (1, bt) output store stays lane-dense.
    # Keep >= 2 tiles when the batch allows it so v7x's two TensorCores both get
    # work via the "parallel" grid axis (harmless on single-TC v5e/v6e).
    num_tiles = max(1, _cdiv(B, batch_tile))
    if num_tiles == 1 and B >= 256:
        num_tiles = 2
    bt = _round_up(_cdiv(B, num_tiles), 128)
    Bp = num_tiles * bt

    x = state.astype(compute_dtype)
    if Bp != B:
        x = jnp.pad(x, ((0, Bp - B), (0, 0)))
    w1c = w1.astype(compute_dtype)
    w2c = w2.astype(compute_dtype)

    # Grid-invariant operands: constant index maps -> no re-DMA per grid step.
    def full(shape):
        return pl.BlockSpec(shape, lambda *_: (0,) * len(shape))

    out3d = pl.pallas_call(
        critic_kernel,
        out_shape=jax.ShapeDtypeStruct((num_tiles, 1, bt), jnp.float32),
        grid_spec=pltpu.PrefetchScalarGridSpec(
            num_scalar_prefetch=0,
            grid=(num_tiles,),
            in_specs=[
                pl.BlockSpec((bt, D), lambda i: (i, 0)),  # state tile (only tiled input)
                full((D, H1)),    # w1
                full((1, H1)),    # b1
                full((H1, H2)),   # w2
                full((1, H2)),    # b2
                full((8, H2)),    # w3 (row 0 real, rows 1..7 zero)
                pl.BlockSpec(memory_space=pltpu.MemorySpace.SMEM),  # b3 scalar
            ],
            out_specs=pl.BlockSpec((None, 1, bt), lambda i: (i, 0, 0)),
        ),
        compiler_params=pltpu.CompilerParams(
            dimension_semantics=("parallel",),
        ),
    )(x, w1c, b1, w2c, b2, w3_row, b3s)

    # (num_tiles, 1, bt) -> (Bp, 1) is a free row-major reshape (row i*bt + b).
    out = out3d.reshape(Bp, 1)
    return out[:B]


def critic_apply(state, params, *, min_pallas_batch=512, **kwargs):
    """At small batches the pallas_call / grid-step overhead dwarfs the ~300K FLOPs,
    so let XLA fuse the 3 layers; otherwise use the Pallas kernel."""
    if state.shape[0] < min_pallas_batch:
        return critic_reference(state, params)
    return critic_forward(state, params, **kwargs)


def init_critic_params(key, state_dim, hidden_sizes=(128, 128), dtype=jnp.float32):
    """Deterministic init mimicking nn.Linear's U(-1/sqrt(fan_in), 1/sqrt(fan_in))."""
    dims = [state_dim, *hidden_sizes, 1]
    params = []
    for i in range(len(dims) - 1):
        fan_in, fan_out = dims[i], dims[i + 1]
        key, kw, kb = jax.random.split(key, 3)
        bound = 1.0 / jnp.sqrt(jnp.float32(fan_in))
        w = jax.random.uniform(kw, (fan_in, fan_out), dtype, -bound, bound)
        b = jax.random.uniform(kb, (1, fan_out), dtype, -bound, bound)
        params.extend([w, b])
    return tuple(params)


def critic_reference(state, params, compute_dtype=None):
    """Pure-JAX reference (optionally with the kernel's low-precision input casts)."""
    w1, b1, w2, b2, w3, b3 = params
    x, w1c, w2c, w3c = state, w1, w2, w3.reshape(-1, 1)
    if compute_dtype is not None:
        x, w1c, w2c, w3c = (x.astype(compute_dtype), w1.astype(compute_dtype),
                            w2.astype(compute_dtype),
                            w3.reshape(-1, 1).astype(compute_dtype))
    h = jnp.maximum(jnp.dot(x, w1c, preferred_element_type=jnp.float32)
                    + b1.reshape(1, -1), 0.0)
    if compute_dtype is not None:
        h = h.astype(compute_dtype)
    h = jnp.maximum(jnp.dot(h, w2c, preferred_element_type=jnp.float32)
                    + b2.reshape(1, -1), 0.0)
    if compute_dtype is not None:
        h = h.astype(compute_dtype)
    return (jnp.dot(h, w3c, preferred_element_type=jnp.float32)
            + b3.reshape(1, 1).astype(jnp.float32))


if __name__ == "__main__":
    key = jax.random.PRNGKey(0)
    key, kx = jax.random.split(key)

    state_dim = 16
    hidden_sizes = (128, 128)
    params = init_critic_params(key, state_dim, hidden_sizes)

    # Main path: bf16 matmul inputs, f32 accumulation; 2 tiles of 256 rows
    # (num_tiles bumped to 2 for v7x megacore, bt 128-aligned, lane-dense store).
    B = 512
    state = jax.random.normal(kx, (B, state_dim), jnp.float32)
    out_bf16 = jax.block_until_ready(
        critic_forward(state, params, batch_tile=4096, compute_dtype=jnp.bfloat16))
    ref_bf16 = critic_reference(state, params, compute_dtype=jnp.bfloat16)
    ref_f32 = critic_reference(state, params)
    assert out_bf16.shape == (B, 1), out_bf16.shape
    assert jnp.allclose(out_bf16, ref_bf16, atol=2e-2, rtol=2e-2), (
        f"max err vs bf16 ref {jnp.max(jnp.abs(out_bf16 - ref_bf16))}")
    assert jnp.allclose(out_bf16, ref_f32, atol=5e-2, rtol=5e-2), (
        f"max err vs f32 ref {jnp.max(jnp.abs(out_bf16 - ref_f32))}")

    # Exactness path: f32 compute on a ragged batch (exercises 128-aligned tile
    # rounding + batch padding + the 2-step grid).
    B2 = 300
    state2 = jax.random.normal(jax.random.PRNGKey(1), (B2, state_dim), jnp.float32)
    out_f32 = jax.block_until_ready(
        critic_forward(state2, params, batch_tile=4096, compute_dtype=jnp.float32))
    ref2 = critic_reference(state2, params)
    assert out_f32.shape == (B2, 1), out_f32.shape
    assert jnp.allclose(out_f32, ref2, atol=2e-4, rtol=2e-4), (
        f"max err {jnp.max(jnp.abs(out_f32 - ref2))}")

    # Tiny-batch dispatch: pure-JAX fallback (kernel launch not worth it at B=8).
    small = jax.random.normal(jax.random.PRNGKey(2), (8, state_dim), jnp.float32)
    small_out = jax.block_until_ready(critic_apply(small, params))
    assert jnp.allclose(small_out, critic_reference(small, params), atol=1e-5)

    print("KERNEL_OK")
</pallas_src>

<mosaic_0001>
module attributes {stable_mosaic.version = 11 : i64} {
  func.func @critic_kernel(%arg0: i32, %arg1: memref<256x16xbf16, #tpu.memory_space<vmem>>, %arg2: memref<16x128xbf16, #tpu.memory_space<vmem>>, %arg3: memref<1x128xf32, #tpu.memory_space<vmem>>, %arg4: memref<128x128xbf16, #tpu.memory_space<vmem>>, %arg5: memref<1x128xf32, #tpu.memory_space<vmem>>, %arg6: memref<8x128xbf16, #tpu.memory_space<vmem>>, %arg7: memref<1x1xf32, #tpu.memory_space<smem>>, %arg8: memref<1x1x256xf32, #tpu.memory_space<vmem>>) attributes {dimension_semantics = [#tpu.dimension_semantics<parallel>], iteration_bounds = array<i64: 2>, scalar_prefetch = 0 : i64, scratch_operands = 0 : i64, tpu.core_type = #tpu.core_type<tc>, window_params = [{transform_indices = @transform_0, window_bounds = array<i64: 256, 16>}, {pipeline_mode = #tpu.pipeline_mode<synchronous>, transform_indices = @transform_1, window_bounds = array<i64: 16, 128>}, {pipeline_mode = #tpu.pipeline_mode<synchronous>, transform_indices = @transform_2, window_bounds = array<i64: 1, 128>}, {pipeline_mode = #tpu.pipeline_mode<synchronous>, transform_indices = @transform_3, window_bounds = array<i64: 128, 128>}, {pipeline_mode = #tpu.pipeline_mode<synchronous>, transform_indices = @transform_4, window_bounds = array<i64: 1, 128>}, {pipeline_mode = #tpu.pipeline_mode<synchronous>, transform_indices = @transform_5, window_bounds = array<i64: 8, 128>}, {transform_indices = @transform_6, window_bounds = array<i64: 1, 1>}, {transform_indices = @transform_7, window_bounds = array<i64: 1, 1, 256>}]} {
    %c0 = arith.constant 0 : index
    %c0_0 = arith.constant 0 : index
    %0 = vector.load %arg1[%c0, %c0_0] : memref<256x16xbf16, #tpu.memory_space<vmem>>, vector<256x16xbf16>
    %c0_1 = arith.constant 0 : index
    %c0_2 = arith.constant 0 : index
    %1 = vector.load %arg2[%c0_1, %c0_2] : memref<16x128xbf16, #tpu.memory_space<vmem>>, vector<16x128xbf16>
    %cst = arith.constant dense<0.000000e+00> : vector<256x128xf32>
    %2 = tpu.matmul %0, %1, %cst {dimension_numbers = #tpu.dot_dimension_numbers<[1], [0], [0], [1], [0, 0, 1, 1], [], []>} : vector<256x16xbf16>, vector<16x128xbf16>, vector<256x128xf32> -> vector<256x128xf32>
    %c0_3 = arith.constant 0 : index
    %c0_4 = arith.constant 0 : index
    %3 = vector.load %arg3[%c0_3, %c0_4] : memref<1x128xf32, #tpu.memory_space<vmem>>, vector<1x128xf32>
    %4 = vector.broadcast %3 : vector<1x128xf32> to vector<256x128xf32>
    %5 = arith.addf %2, %4 : vector<256x128xf32>
    %cst_5 = arith.constant 0.000000e+00 : f32
    %6 = vector.broadcast %cst_5 : f32 to vector<256x128xf32>
    %7 = arith.maximumf %5, %6 : vector<256x128xf32>
    %8 = arith.truncf %7 : vector<256x128xf32> to vector<256x128xbf16>
    %c0_6 = arith.constant 0 : index
    %c0_7 = arith.constant 0 : index
    %9 = vector.load %arg4[%c0_6, %c0_7] : memref<128x128xbf16, #tpu.memory_space<vmem>>, vector<128x128xbf16>
    %cst_8 = arith.constant dense<0.000000e+00> : vector<256x128xf32>
    %10 = tpu.matmul %8, %9, %cst_8 {dimension_numbers = #tpu.dot_dimension_numbers<[1], [0], [0], [1], [0, 0, 1, 1], [], []>} : vector<256x128xbf16>, vector<128x128xbf16>, vector<256x128xf32> -> vector<256x128xf32>
    %c0_9 = arith.constant 0 : index
    %c0_10 = arith.constant 0 : index
    %11 = vector.load %arg5[%c0_9, %c0_10] : memref<1x128xf32, #tpu.memory_space<vmem>>, vector<1x128xf32>
    %12 = vector.broadcast %11 : vector<1x128xf32> to vector<256x128xf32>
    %13 = arith.addf %10, %12 : vector<256x128xf32>
    %cst_11 = arith.constant 0.000000e+00 : f32
    %14 = vector.broadcast %cst_11 : f32 to vector<256x128xf32>
    %15 = arith.maximumf %13, %14 : vector<256x128xf32>
    %c0_12 = arith.constant 0 : index
    %c0_13 = arith.constant 0 : index
    %16 = vector.load %arg6[%c0_12, %c0_13] : memref<8x128xbf16, #tpu.memory_space<vmem>>, vector<8x128xbf16>
    %17 = arith.truncf %15 : vector<256x128xf32> to vector<256x128xbf16>
    "tpu.trace_start"() <{level = 10 : i32, message = "oh,bh->ob"}> : () -> ()
    %cst_14 = arith.constant dense<0.000000e+00> : vector<8x256xf32>
    %18 = tpu.matmul %16, %17, %cst_14 {dimension_numbers = #tpu.dot_dimension_numbers<[1], [1], [0], [0], [0, 0, 1, 0], [], []>} : vector<8x128xbf16>, vector<256x128xbf16>, vector<8x256xf32> -> vector<8x256xf32>
    "tpu.trace_stop"() : () -> ()
    %19 = vector.extract_strided_slice %18 {offsets = [0, 0], sizes = [1, 256], strides = [1, 1]} : vector<8x256xf32> to vector<1x256xf32>
    %c0_15 = arith.constant 0 : index
    %c0_16 = arith.constant 0 : index
    %20 = memref.load %arg7[%c0_15, %c0_16] : memref<1x1xf32, #tpu.memory_space<smem>>
    %21 = vector.broadcast %20 : f32 to vector<1x256xf32>
    %22 = arith.addf %19, %21 : vector<1x256xf32>
    %c0_17 = arith.constant 0 : index
    %c0_18 = arith.constant 0 : index
    %c0_19 = arith.constant 0 : index
    %23 = vector.load %arg8[%c0_17, %c0_18, %c0_19] : memref<1x1x256xf32, #tpu.memory_space<vmem>>, vector<1x1x256xf32>
    %24 = vector.shape_cast %23 : vector<1x1x256xf32> to vector<1x256xf32>
    %25 = vector.shape_cast %22 : vector<1x256xf32> to vector<1x1x256xf32>
    tpu.vector_store %arg8[%c0_17, %c0_18, %c0_19], %25 {strides = array<i32>} : memref<1x1x256xf32, #tpu.memory_space<vmem>>, vector<1x1x256xf32>,
    return
  }
  func.func @transform_0(%arg0: i32) -> (i32, i32) {
    %c0_i32 = arith.constant 0 : i32
    %c0_i32_0 = arith.constant 0 : i32
    return %arg0, %c0_i32 : i32, i32
  }
  func.func @transform_1(%arg0: i32) -> (i32, i32) {
    %c0_i32 = arith.constant 0 : i32
    %c0_i32_0 = arith.constant 0 : i32
    %c0_i32_1 = arith.constant 0 : i32
    return %c0_i32, %c0_i32_0 : i32, i32
  }
  func.func @transform_2(%arg0: i32) -> (i32, i32) {
    %c0_i32 = arith.constant 0 : i32
    %c0_i32_0 = arith.constant 0 : i32
    %c0_i32_1 = arith.constant 0 : i32
    return %c0_i32, %c0_i32_0 : i32, i32
  }
  func.func @transform_3(%arg0: i32) -> (i32, i32) {
    %c0_i32 = arith.constant 0 : i32
    %c0_i32_0 = arith.constant 0 : i32
    %c0_i32_1 = arith.constant 0 : i32
    return %c0_i32, %c0_i32_0 : i32, i32
  }
  func.func @transform_4(%arg0: i32) -> (i32, i32) {
    %c0_i32 = arith.constant 0 : i32
    %c0_i32_0 = arith.constant 0 : i32
    %c0_i32_1 = arith.constant 0 : i32
    return %c0_i32, %c0_i32_0 : i32, i32
  }
  func.func @transform_5(%arg0: i32) -> (i32, i32) {
    %c0_i32 = arith.constant 0 : i32
    %c0_i32_0 = arith.constant 0 : i32
    %c0_i32_1 = arith.constant 0 : i32
    return %c0_i32, %c0_i32_0 : i32, i32
  }
  func.func @transform_6(%arg0: i32) -> (i32, i32) {
    %c0_i32 = arith.constant 0 : i32
    %c0_i32_0 = arith.constant 0 : i32
    %c0_i32_1 = arith.constant 0 : i32
    return %c0_i32, %c0_i32_0 : i32, i32
  }
  func.func @transform_7(%arg0: i32) -> (i32, i32, i32) {
    %c0_i32 = arith.constant 0 : i32
    %c0_i32_0 = arith.constant 0 : i32
    %c0_i32_1 = arith.constant 0 : i32
    return %arg0, %c0_i32, %c0_i32_0 : i32, i32, i32
  }
}

</mosaic_0001>

<llo_original>
// kernel: tpu_custom_call.1
$region0: #{tpu_custom_call.1}
  #allocation0 [shape = 'u32[]', space=smem, size = 0x4, offset = 0x4, fixed_abs, tag = 'smem constant byte address 0x4 - core index']
  #allocation1 [shape = 'u32[144,128]{1,0:T(1,128)}', space=vmem, size = 0x12000, scoped, tag = 'internal scratch']
  #allocation2 [shape = 'f32[1,1]{1,0:T(1,128)S(6)}', space=smem, size = 0x200, scoped, tag = 'scoped memory for tpu_custom_call.1']
  %s0 = inlined_call_operand.vmem [shape: bf16[512,16], index: 0, kind: input, shape index: {}]
  %s1 = inlined_call_operand.vmem [shape: bf16[16,128], index: 1, kind: input, shape index: {}]
  %s2 = inlined_call_operand.vmem [shape: f32[1,128], index: 2, kind: input, shape index: {}]
  %s3 = inlined_call_operand.vmem [shape: bf16[128,128], index: 3, kind: input, shape index: {}]
  %s4 = inlined_call_operand.vmem [shape: f32[1,128], index: 4, kind: input, shape index: {}]
  %s5 = inlined_call_operand.vmem [shape: bf16[8,128], index: 5, kind: input, shape index: {}]
  %s6 = inlined_call_operand.<no memory space> [shape: f32[1,1], index: 6, kind: input, shape index: {}]
  %s7 = inlined_call_operand.hbm [shape: f32[2,1,256], index: 7, kind: output, shape index: {}]
  %s8 = sld [smem:[#allocation0]]
  $region61: #{tpu_custom_call.1} parent=0
    _
  %s10 = ssub.s32 1, %s8
  %s11 = scalar_select 0, %s10, %s8
  %12 = sst [smem:[#allocation2]] %s6
  $region1: #{tpu_custom_call.1} parent=0
    #allocation3 [shape = 'u8[2048]{0}', space=vmem, size = 0x800, scoped, tag = 'output window, operand 0']
    #allocation4 [shape = 's32[2]{0}', space=sflag, size = 0x8, scoped, tag = 'scoped memory for tpu_custom_call.1']
    %13 = vsyncpa [#allocation4], 0
    %s14 = scalar_lea.sflag [#allocation4], 1
    %15 = vsyncpa %s14, 0
    loop: start=0, step=1, limit=4
    $region2: #{tpu_custom_call.1} parent=1 // loop_pre_header
      _
    $region3: #{tpu_custom_call.1} parent=1 // loop_header
      %s17 = sphi 0, %s21
      %p18 = scmp.ge.s32.totalorder %s17, 4
      %s27 = sphi 0, %s29
      %s30 = sphi 0, %s27
      %s31 = sphi 0, %s30
      %s47 = sphi 0, %s31
      %s51 = sphi 0, %s51
      %s53 = sphi 0, %s51
      %s54 = sphi 0, %s53
      %s68 = sphi 0, %s54
      %s72 = sphi 0, %s72
      %s74 = sphi 0, %s72
      %s75 = sphi 0, %s74
      %s89 = sphi 0, %s75
      %s93 = sphi 0, %s93
      %s95 = sphi 0, %s93
      %s96 = sphi 0, %s95
      %s110 = sphi 0, %s96
      %s114 = sphi 0, %s114
      %s116 = sphi 0, %s114
      %s117 = sphi 0, %s116
      %s131 = sphi 0, %s117
      %s135 = sphi 0, %s135
      %s137 = sphi 0, %s135
      %s138 = sphi 0, %s137
      %s152 = sphi 0, %s138
      %s156 = sphi 0, %s156
      %s158 = sphi 0, %s156
      %s159 = sphi 0, %s158
      %s173 = sphi 0, %s159
      %s179 = sphi 0, %s181
      %s182 = sphi 0, %s179
      %s183 = sphi 0, %s182
      %s199 = sphi 0, %s183
    $region4: #{tpu_custom_call.1} parent=1 // loop_header_branch
      %20 = sbr.rel (%p18) target = $region8
    $region5: #{tpu_custom_call.1} parent=1 // loop_body
      %s22 = ssub.s32 %s17, 1
      %s23 = ssub.s32 %s17, 2
      %s24 = sadd.s32 %s17, 1
      %s25 = ssub.s32 %s17, %s24
      %p26 = scmp.eq.s32.totalorder %s25, 0
      %s28 = sadd.s32 %s27, 1
      %s29 = scalar_select %p26, %s27, %s28
      %p32 = pneg %p26
      %p33 = scmp.eq.s32.totalorder %s17, 1
      %p34 = por %p32, %p33
      %p35 = scmp.ne.s32.totalorder %s27, %s30
      %p36 = scmp.eq.s32.totalorder %s17, 0
      %p37 = por %p35, %p36
      %p38 = scmp.ne.s32.totalorder %s27, %s30
      %p39 = scmp.eq.s32.totalorder %s22, 1
      %p40 = por %p38, %p39
      %p41 = scmp.ne.s32.totalorder %s30, %s31
      %p42 = scmp.eq.s32.totalorder %s22, 0
      %p43 = por %p41, %p42
      %p44 = scmp.ne.s32.totalorder %s30, %s31
      %p45 = scmp.eq.s32.totalorder %s23, 1
      %p46 = por %p44, %p45
      %p48 = scmp.ne.s32.totalorder %s31, %s47
      %p49 = scmp.eq.s32.totalorder %s23, 0
      %p50 = por %p48, %p49
      %s52 = sadd.s32 %s51, 1
      %p55 = scmp.eq.s32.totalorder %s17, 1
      %p56 = scmp.ne.s32.totalorder %s51, %s53
      %p57 = scmp.eq.s32.totalorder %s17, 0
      %p58 = por %p56, %p57
      %p59 = scmp.ne.s32.totalorder %s51, %s53
      %p60 = scmp.eq.s32.totalorder %s22, 1
      %p61 = por %p59, %p60
      %p62 = scmp.ne.s32.totalorder %s53, %s54
      %p63 = scmp.eq.s32.totalorder %s22, 0
      %p64 = por %p62, %p63
      %p65 = scmp.ne.s32.totalorder %s53, %s54
      %p66 = scmp.eq.s32.totalorder %s23, 1
      %p67 = por %p65, %p66
      %p69 = scmp.ne.s32.totalorder %s54, %s68
      %p70 = scmp.eq.s32.totalorder %s23, 0
      %p71 = por %p69, %p70
      %s73 = sadd.s32 %s72, 1
      %p76 = scmp.eq.s32.totalorder %s17, 1
      %p77 = scmp.ne.s32.totalorder %s72, %s74
      %p78 = scmp.eq.s32.totalorder %s17, 0
      %p79 = por %p77, %p78
      %p80 = scmp.ne.s32.totalorder %s72, %s74
      %p81 = scmp.eq.s32.totalorder %s22, 1
      %p82 = por %p80, %p81
      %p83 = scmp.ne.s32.totalorder %s74, %s75
      %p84 = scmp.eq.s32.totalorder %s22, 0
      %p85 = por %p83, %p84
      %p86 = scmp.ne.s32.totalorder %s74, %s75
      %p87 = scmp.eq.s32.totalorder %s23, 1
      %p88 = por %p86, %p87
      %p90 = scmp.ne.s32.totalorder %s75, %s89
      %p91 = scmp.eq.s32.totalorder %s23, 0
      %p92 = por %p90, %p91
      %s94 = sadd.s32 %s93, 1
      %p97 = scmp.eq.s32.totalorder %s17, 1
      %p98 = scmp.ne.s32.totalorder %s93, %s95
      %p99 = scmp.eq.s32.totalorder %s17, 0
      %p100 = por %p98, %p99
      %p101 = scmp.ne.s32.totalorder %s93, %s95
      %p102 = scmp.eq.s32.totalorder %s22, 1
      %p103 = por %p101, %p102
      %p104 = scmp.ne.s32.totalorder %s95, %s96
      %p105 = scmp.eq.s32.totalorder %s22, 0
      %p106 = por %p104, %p105
      %p107 = scmp.ne.s32.totalorder %s95, %s96
      %p108 = scmp.eq.s32.totalorder %s23, 1
      %p109 = por %p107, %p108
      %p111 = scmp.ne.s32.totalorder %s96, %s110
      %p112 = scmp.eq.s32.totalorder %s23, 0
      %p113 = por %p111, %p112
      %s115 = sadd.s32 %s114, 1
      %p118 = scmp.eq.s32.totalorder %s17, 1
      %p119 = scmp.ne.s32.totalorder %s114, %s116
      %p120 = scmp.eq.s32.totalorder %s17, 0
      %p121 = por %p119, %p120
      %p122 = scmp.ne.s32.totalorder %s114, %s116
      %p123 = scmp.eq.s32.totalorder %s22, 1
      %p124 = por %p122, %p123
      %p125 = scmp.ne.s32.totalorder %s116, %s117
      %p126 = scmp.eq.s32.totalorder %s22, 0
      %p127 = por %p125, %p126
      %p128 = scmp.ne.s32.totalorder %s116, %s117
      %p129 = scmp.eq.s32.totalorder %s23, 1
      %p130 = por %p128, %p129
      %p132 = scmp.ne.s32.totalorder %s117, %s131
      %p133 = scmp.eq.s32.totalorder %s23, 0
      %p134 = por %p132, %p133
      %s136 = sadd.s32 %s135, 1
      %p139 = scmp.eq.s32.totalorder %s17, 1
      %p140 = scmp.ne.s32.totalorder %s135, %s137
      %p141 = scmp.eq.s32.totalorder %s17, 0
      %p142 = por %p140, %p141
      %p143 = scmp.ne.s32.totalorder %s135, %s137
      %p144 = scmp.eq.s32.totalorder %s22, 1
      %p145 = por %p143, %p144
      %p146 = scmp.ne.s32.totalorder %s137, %s138
      %p147 = scmp.eq.s32.totalorder %s22, 0
      %p148 = por %p146, %p147
      %p149 = scmp.ne.s32.totalorder %s137, %s138
      %p150 = scmp.eq.s32.totalorder %s23, 1
      %p151 = por %p149, %p150
      %p153 = scmp.ne.s32.totalorder %s138, %s152
      %p154 = scmp.eq.s32.totalorder %s23, 0
      %p155 = por %p153, %p154
      %s157 = sadd.s32 %s156, 1
      %p160 = scmp.eq.s32.totalorder %s17, 1
      %p161 = scmp.ne.s32.totalorder %s156, %s158
      %p162 = scmp.eq.s32.totalorder %s17, 0
      %p163 = por %p161, %p162
      %p164 = scmp.ne.s32.totalorder %s156, %s158
      %p165 = scmp.eq.s32.totalorder %s22, 1
      %p166 = por %p164, %p165
      %p167 = scmp.ne.s32.totalorder %s158, %s159
      %p168 = scmp.eq.s32.totalorder %s22, 0
      %p169 = por %p167, %p168
      %p170 = scmp.ne.s32.totalorder %s158, %s159
      %p171 = scmp.eq.s32.totalorder %s23, 1
      %p172 = por %p170, %p171
      %p174 = scmp.ne.s32.totalorder %s159, %s173
      %p175 = scmp.eq.s32.totalorder %s23, 0
      %p176 = por %p174, %p175
      %s177 = ssub.s32 %s17, %s24
      %p178 = scmp.eq.s32.totalorder %s177, 0
      %s180 = sadd.s32 %s179, 1
      %s181 = scalar_select %p178, %s179, %s180
      %p184 = pneg %p178
      %p185 = scmp.eq.s32.totalorder %s17, 1
      %p186 = por %p184, %p185
      %p187 = scmp.ne.s32.totalorder %s179, %s182
      %p188 = scmp.eq.s32.totalorder %s17, 0
      %p189 = por %p187, %p188
      %p190 = scmp.ne.s32.totalorder %s179, %s182
      %p191 = scmp.eq.s32.totalorder %s22, 1
      %p192 = por %p190, %p191
      %p193 = scmp.ne.s32.totalorder %s182, %s183
      %p194 = scmp.eq.s32.totalorder %s22, 0
      %p195 = por %p193, %p194
      %p196 = scmp.ne.s32.totalorder %s182, %s183
      %p197 = scmp.eq.s32.totalorder %s23, 1
      %p198 = por %p196, %p197
      %p200 = scmp.ne.s32.totalorder %s183, %s199
      %p201 = scmp.eq.s32.totalorder %s23, 0
      %p202 = por %p200, %p201
      %p203 = scmp.le.s32.totalorder 1, %s17
      %p204 = scmp.lt.s32.totalorder %s17, 3
      %p205 = pnand %p203, %p204
      %p206 = pneg %p205
      // Predicated region
      $region9: #{tpu_custom_call.1} parent=5 // pred_check
        _
      $region10: #{tpu_custom_call.1} parent=5 // pred_check_branch
        %208 = sbr.rel (%p205) target = $region12
      $region11: #{tpu_custom_call.1} parent=5 // pred_region
        %s209 = ssub.s32 %s17, 1
        // Predicated region
        $region13: #{tpu_custom_call.1} parent=11 // pred_check
          %p210 = pneg %p64
        $region14: #{tpu_custom_call.1} parent=11 // pred_check_branch
          %212 = sbr.rel (%p210) target = $region16
        $region15: #{tpu_custom_call.1} parent=11 // pred_region
          _
        $region16: #{tpu_custom_call.1} parent=11 // pred_fallthru
          _
        // Predicated region
        $region17: #{tpu_custom_call.1} parent=11 // pred_check
          %p213 = pneg %p85
        $region18: #{tpu_custom_call.1} parent=11 // pred_check_branch
          %215 = sbr.rel (%p213) target = $region20
        $region19: #{tpu_custom_call.1} parent=11 // pred_region
          _
        $region20: #{tpu_custom_call.1} parent=11 // pred_fallthru
          _
        // Predicated region
        $region21: #{tpu_custom_call.1} parent=11 // pred_check
          %p216 = pneg %p106
        $region22: #{tpu_custom_call.1} parent=11 // pred_check_branch
          %218 = sbr.rel (%p216) target = $region24
        $region23: #{tpu_custom_call.1} parent=11 // pred_region
          _
        $region24: #{tpu_custom_call.1} parent=11 // pred_fallthru
          _
        // Predicated region
        $region25: #{tpu_custom_call.1} parent=11 // pred_check
          %p219 = pneg %p127
        $region26: #{tpu_custom_call.1} parent=11 // pred_check_branch
          %221 = sbr.rel (%p219) target = $region28
        $region27: #{tpu_custom_call.1} parent=11 // pred_region
          _
        $region28: #{tpu_custom_call.1} parent=11 // pred_fallthru
          _
        // Predicated region
        $region29: #{tpu_custom_call.1} parent=11 // pred_check
          %p222 = pneg %p148
        $region30: #{tpu_custom_call.1} parent=11 // pred_check_branch
          %224 = sbr.rel (%p222) target = $region32
        $region31: #{tpu_custom_call.1} parent=11 // pred_region
          _
        $region32: #{tpu_custom_call.1} parent=11 // pred_fallthru
          _
        // Predicated region
        $region33: #{tpu_custom_call.1} parent=11 // pred_check
          %p225 = pneg %p169
        $region34: #{tpu_custom_call.1} parent=11 // pred_check_branch
          %227 = sbr.rel (%p225) target = $region36
        $region35: #{tpu_custom_call.1} parent=11 // pred_region
          _
        $region36: #{tpu_custom_call.1} parent=11 // pred_fallthru
          _
      $region12: #{tpu_custom_call.1} parent=5 // pred_fallthru
        _
      %p228 = scmp.lt.s32.totalorder %s17, 2
      // Predicated region
      $region37: #{tpu_custom_call.1} parent=5 // pred_check
        %p229 = pneg %p228
      $region38: #{tpu_custom_call.1} parent=5 // pred_check_branch
        %231 = sbr.rel (%p229) target = $region40
      $region39: #{tpu_custom_call.1} parent=5 // pred_region
        // Predicated region
        $region41: #{tpu_custom_call.1} parent=39 // pred_check
          %p232 = pneg %p37
        $region42: #{tpu_custom_call.1} parent=39 // pred_check_branch
          %234 = sbr.rel (%p232) target = $region44
        $region43: #{tpu_custom_call.1} parent=39 // pred_region
          %s235 = smul.u32 32, %s17
          %p236 = scmp.lt.s32.totalorder %s235, 63
          %s237 = scalar_select %p236, %s235, 63
          %s238 = smul.addr %s237, 4
          %s239 = scalar_lea.vmem %s0, %s238
          %s240 = smul.u32 32, %s17
        $region44: #{tpu_custom_call.1} parent=39 // pred_fallthru
          _
      $region40: #{tpu_custom_call.1} parent=5 // pred_fallthru
        _
      %p241 = scmp.le.s32.totalorder 1, %s17
      %p242 = scmp.lt.s32.totalorder %s17, 3
      %p243 = pnand %p241, %p242
      %p244 = pneg %p243
      // Predicated region
      $region45: #{tpu_custom_call.1} parent=5 // pred_check
        _
      $region46: #{tpu_custom_call.1} parent=5 // pred_check_branch
        %246 = sbr.rel (%p243) target = $region48
      $region47: #{tpu_custom_call.1} parent=5 // pred_region
        %s247 = ssub.s32 %s17, 1
        %s248 = smul.u32 32, %s22
        %p249 = scmp.lt.s32.totalorder %s248, 63
        %s250 = scalar_select %p249, %s248, 63
        %s251 = smul.addr %s250, 4
        %s252 = scalar_lea.vmem %s0, %s251
        %p253 = pneg %p43
        %p254 = pneg %p40
        %p255 = pneg %p64
        %p256 = pneg %p61
        %p257 = pneg %p85
        %p258 = pneg %p82
        %p259 = pneg %p106
        %p260 = pneg %p103
        %p261 = pneg %p127
        %p262 = pneg %p124
        %p263 = pneg %p148
        %p264 = pneg %p145
        %p265 = pneg %p169
        %p266 = pneg %p166
        %p267 = pneg %p195
        %p268 = pneg %p192
        %s269 = sand.u32 %s182, 1
        %s270 = scalar_lea.sflag [#allocation4], %s269
        %s271 = sand.u32 %s182, 1
        %s272 = smul.addr %s271, 2
        %s273 = scalar_lea.vmem [#allocation3], %s272
        %s274 = smul.u32 32, %s22
        %p275 = scmp.lt.s32.totalorder %s274, 63
        %s276 = scalar_select %p275, %s274, 63
        %s277 = smul.addr %s276, 4
        %s278 = scalar_lea.vmem %s0, %s277
        %s279 = smul.u32 32, %s22
        %v281 = vld [vmem:[%s278] sm:$0xf]
        %v282 = vld [vmem:[%s278 + $0x4] sm:$0xf]
        %v283 = vld [vmem:[%s278 + $0x8] sm:$0xf]
        %v284 = vld [vmem:[%s278 + $0xc] sm:$0xf]
        %v285 = vld [vmem:[%s278 + $0x10] sm:$0xf]
        %v286 = vld [vmem:[%s278 + $0x14] sm:$0xf]
        %v287 = vld [vmem:[%s278 + $0x18] sm:$0xf]
        %v288 = vld [vmem:[%s278 + $0x1c] sm:$0xf]
        %v289 = vld [vmem:[%s278 + $0x20] sm:$0xf]
        %v290 = vld [vmem:[%s278 + $0x24] sm:$0xf]
        %v291 = vld [vmem:[%s278 + $0x28] sm:$0xf]
        %v292 = vld [vmem:[%s278 + $0x2c] sm:$0xf]
        %v293 = vld [vmem:[%s278 + $0x30] sm:$0xf]
        %v294 = vld [vmem:[%s278 + $0x34] sm:$0xf]
        %v295 = vld [vmem:[%s278 + $0x38] sm:$0xf]
        %v296 = vld [vmem:[%s278 + $0x3c] sm:$0xf]
        %v297 = vld [vmem:[%s278 + $0x40] sm:$0xf]
        %v298 = vld [vmem:[%s278 + $0x44] sm:$0xf]
        %v299 = vld [vmem:[%s278 + $0x48] sm:$0xf]
        %v300 = vld [vmem:[%s278 + $0x4c] sm:$0xf]
        %v301 = vld [vmem:[%s278 + $0x50] sm:$0xf]
        %v302 = vld [vmem:[%s278 + $0x54] sm:$0xf]
        %v303 = vld [vmem:[%s278 + $0x58] sm:$0xf]
        %v304 = vld [vmem:[%s278 + $0x5c] sm:$0xf]
        %v305 = vld [vmem:[%s278 + $0x60] sm:$0xf]
        %v306 = vld [vmem:[%s278 + $0x64] sm:$0xf]
        %v307 = vld [vmem:[%s278 + $0x68] sm:$0xf]
        %v308 = vld [vmem:[%s278 + $0x6c] sm:$0xf]
        %v309 = vld [vmem:[%s278 + $0x70] sm:$0xf]
        %v310 = vld [vmem:[%s278 + $0x74] sm:$0xf]
        %v311 = vld [vmem:[%s278 + $0x78] sm:$0xf]
        %v312 = vld [vmem:[%s278 + $0x7c] sm:$0xf]
        %v313 = vld [vmem:[%s1] sm:$0xf]
        %v314 = vld [vmem:[%s1 + $0x4] sm:$0xf]
        %v315 = vld [vmem:[%s2] sm:$0x1]
        %v317 = vlaneseq
        %v318 = vshrl.u32 %v317, 7
        %v319 = vsub.s32 0, %v318
        %v320 = vrot.slane %v315, %v319
        %v354 = vunpack.c.l.b16 %v281
        %v355 = vunpack.c.l.b16 %v282
        %v356 = vunpack.c.l.b16 %v283
        %v357 = vunpack.c.l.b16 %v284
        %v358 = vunpack.c.l.b16 %v285
        %v359 = vunpack.c.l.b16 %v286
        %v360 = vunpack.c.l.b16 %v287
        %v361 = vunpack.c.l.b16 %v288
        %v362 = vunpack.c.l.b16 %v289
        %v363 = vunpack.c.l.b16 %v290
        %v364 = vunpack.c.l.b16 %v291
        %v365 = vunpack.c.l.b16 %v292
        %v366 = vunpack.c.l.b16 %v293
        %v367 = vunpack.c.l.b16 %v294
        %v368 = vunpack.c.l.b16 %v295
        %v369 = vunpack.c.l.b16 %v296
        %v370 = vunpack.c.l.b16 %v297
        %v371 = vunpack.c.l.b16 %v298
        %v372 = vunpack.c.l.b16 %v299
        %v373 = vunpack.c.l.b16 %v300
        %v374 = vunpack.c.l.b16 %v301
        %v375 = vunpack.c.l.b16 %v302
        %v376 = vunpack.c.l.b16 %v303
        %v377 = vunpack.c.l.b16 %v304
        %v378 = vunpack.c.l.b16 %v305
        %v379 = vunpack.c.l.b16 %v306
        %v380 = vunpack.c.l.b16 %v307
        %v381 = vunpack.c.l.b16 %v308
        %v382 = vunpack.c.l.b16 %v309
        %v383 = vunpack.c.l.b16 %v310
        %v384 = vunpack.c.l.b16 %v311
        %v385 = vunpack.c.l.b16 %v312
        %v386 = vpack.c.b16 %v355, %v354
        %v387 = vpack.c.b16 %v357, %v356
        %v388 = vpack.c.b16 %v359, %v358
        %v389 = vpack.c.b16 %v361, %v360
        %v390 = vpack.c.b16 %v363, %v362
        %v391 = vpack.c.b16 %v365, %v364
        %v392 = vpack.c.b16 %v367, %v366
        %v393 = vpack.c.b16 %v369, %v368
        %v394 = vpack.c.b16 %v371, %v370
        %v395 = vpack.c.b16 %v373, %v372
        %v396 = vpack.c.b16 %v375, %v374
        %v397 = vpack.c.b16 %v377, %v376
        %v398 = vpack.c.b16 %v379, %v378
        %v399 = vpack.c.b16 %v381, %v380
        %v400 = vpack.c.b16 %v383, %v382
        %v401 = vpack.c.b16 %v385, %v384
        %v404 = vunpack.c.l.b16 %v313
        %v405 = vunpack.c.l.b16 %v314
        %v406 = vpack.c.b16 %v405, %v404
        %vm408 = vcmask 130048
        %v410 = vsel %vm408, %v386, 0
        %v413 = vsel %vm408, %v387, 0
        %v416 = vsel %vm408, %v388, 0
        %v419 = vsel %vm408, %v389, 0
        %v422 = vsel %vm408, %v390, 0
        %v425 = vsel %vm408, %v391, 0
        %v428 = vsel %vm408, %v392, 0
        %v431 = vsel %vm408, %v393, 0
        %v434 = vsel %vm408, %v394, 0
        %v437 = vsel %vm408, %v395, 0
        %v440 = vsel %vm408, %v396, 0
        %v443 = vsel %vm408, %v397, 0
        %v446 = vsel %vm408, %v398, 0
        %v449 = vsel %vm408, %v399, 0
        %v452 = vsel %vm408, %v400, 0
        %v455 = vsel %vm408, %v401, 0
        %457 = vmatprep.subr.bf16.mxu0 0
        %458 = vmatpush1.bf16.msra.mxu0 0
        %459 = vmatprep.subr.bf16.mxu0 0
        %460 = vmatpush1.bf16.msra.mxu0 0
        %461 = vmatprep.subr.bf16.mxu0 0
        %462 = vmatpush1.bf16.msra.mxu0 0
        %463 = vmatprep.subr.bf16.mxu0 0
        %464 = vmatpush1.bf16.msra.mxu0 0
        %465 = vmatprep.subr.bf16.mxu0 0
        %466 = vmatpush1.bf16.msra.mxu0 0
        %467 = vmatprep.subr.bf16.mxu0 0
        %468 = vmatpush1.bf16.msra.mxu0 0
        %469 = vmatprep.subr.bf16.mxu0 0
        %470 = vmatpush1.bf16.msra.mxu0 0
        %471 = vmatprep.subr.bf16.mxu0 0
        %472 = vmatpush1.bf16.msra.mxu0 %v406
        %473 = vmatprep.subr.bf16.mxu0 0
        %474 = vmatpush2.bf16.msra.mxu0 0
        %475 = vmatprep.subr.bf16.mxu0 0
        %476 = vmatpush2.bf16.msra.mxu0 0
        %477 = vmatprep.subr.bf16.mxu0 0
        %478 = vmatpush2.bf16.msra.mxu0 0
        %479 = vmatprep.subr.bf16.mxu0 0
        %480 = vmatpush2.bf16.msra.mxu0 0
        %481 = vmatprep.subr.bf16.mxu0 0
        %482 = vmatpush2.bf16.msra.mxu0 0
        %483 = vmatprep.subr.bf16.mxu0 0
        %484 = vmatpush2.bf16.msra.mxu0 0
        %485 = vmatprep.subr.bf16.mxu0 0
        %486 = vmatpush2.bf16.msra.mxu0 0
        %487 = vmatprep.subr.bf16.mxu0 0
        %488 = vmatpush2.bf16.msra.mxu0 0
        %489 = vmatprep.mubr.bf16.mxu0 0
        %490 = vmatmul.mubr.bf16.gmra.mxu0 %v410
        %v491 = vpop.f32.mrf.mxu0
        %v492 = vadd.f32 %v320, %v491
        %v493 = vpop.f32.mrf.mxu0
        %v494 = vpop.f32.mrf.mxu0
        %v495 = vadd.f32 %v320, %v494
        %v496 = vpop.f32.mrf.mxu0
        %497 = vmatprep.mubr.bf16.mxu0 0
        %498 = vmatmul.mubr.bf16.gmra.mxu0 %v413
        %v499 = vpop.f32.mrf.mxu0
        %v500 = vadd.f32 %v320, %v499
        %v501 = vpop.f32.mrf.mxu0
        %v502 = vpop.f32.mrf.mxu0
        %v503 = vadd.f32 %v320, %v502
        %v504 = vpop.f32.mrf.mxu0
        %505 = vmatprep.mubr.bf16.mxu0 0
        %506 = vmatmul.mubr.bf16.gmra.mxu0 %v416
        %v507 = vpop.f32.mrf.mxu0
        %v508 = vadd.f32 %v320, %v507
        %v509 = vpop.f32.mrf.mxu0
        %v510 = vpop.f32.mrf.mxu0
        %v511 = vadd.f32 %v320, %v510
        %v512 = vpop.f32.mrf.mxu0
        %513 = vmatprep.mubr.bf16.mxu0 0
        %514 = vmatmul.mubr.bf16.gmra.mxu0 %v419
        %v515 = vpop.f32.mrf.mxu0
        %v516 = vadd.f32 %v320, %v515
        %v517 = vpop.f32.mrf.mxu0
        %v518 = vpop.f32.mrf.mxu0
        %v519 = vadd.f32 %v320, %v518
        %v520 = vpop.f32.mrf.mxu0
        %521 = vmatprep.mubr.bf16.mxu0 0
        %522 = vmatmul.mubr.bf16.gmra.mxu0 %v422
        %v523 = vpop.f32.mrf.mxu0
        %v524 = vadd.f32 %v320, %v523
        %v525 = vpop.f32.mrf.mxu0
        %v526 = vpop.f32.mrf.mxu0
        %v527 = vadd.f32 %v320, %v526
        %v528 = vpop.f32.mrf.mxu0
        %529 = vmatprep.mubr.bf16.mxu0 0
        %530 = vmatmul.mubr.bf16.gmra.mxu0 %v425
        %v531 = vpop.f32.mrf.mxu0
        %v532 = vadd.f32 %v320, %v531
        %v533 = vpop.f32.mrf.mxu0
        %v534 = vpop.f32.mrf.mxu0
        %v535 = vadd.f32 %v320, %v534
        %v536 = vpop.f32.mrf.mxu0
        %537 = vmatprep.mubr.bf16.mxu0 0
        %538 = vmatmul.mubr.bf16.gmra.mxu0 %v428
        %v539 = vpop.f32.mrf.mxu0
        %v540 = vadd.f32 %v320, %v539
        %v541 = vpop.f32.mrf.mxu0
        %v542 = vpop.f32.mrf.mxu0
        %v543 = vadd.f32 %v320, %v542
        %v544 = vpop.f32.mrf.mxu0
        %545 = vmatprep.mubr.bf16.mxu0 0
        %546 = vmatmul.mubr.bf16.gmra.mxu0 %v431
        %v547 = vpop.f32.mrf.mxu0
        %v548 = vadd.f32 %v320, %v547
        %v549 = vpop.f32.mrf.mxu0
        %v550 = vpop.f32.mrf.mxu0
        %v551 = vadd.f32 %v320, %v550
        %v552 = vpop.f32.mrf.mxu0
        %553 = vmatprep.mubr.bf16.mxu0 0
        %554 = vmatmul.mubr.bf16.gmra.mxu0 %v434
        %v555 = vpop.f32.mrf.mxu0
        %v556 = vadd.f32 %v320, %v555
        %v557 = vpop.f32.mrf.mxu0
        %v558 = vpop.f32.mrf.mxu0
        %v559 = vadd.f32 %v320, %v558
        %v560 = vpop.f32.mrf.mxu0
        %561 = vmatprep.mubr.bf16.mxu0 0
        %562 = vmatmul.mubr.bf16.gmra.mxu0 %v437
        %v563 = vpop.f32.mrf.mxu0
        %v564 = vadd.f32 %v320, %v563
        %v565 = vpop.f32.mrf.mxu0
        %v566 = vpop.f32.mrf.mxu0
        %v567 = vadd.f32 %v320, %v566
        %v568 = vpop.f32.mrf.mxu0
        %569 = vmatprep.mubr.bf16.mxu0 0
        %570 = vmatmul.mubr.bf16.gmra.mxu0 %v440
        %v571 = vpop.f32.mrf.mxu0
        %v572 = vadd.f32 %v320, %v571
        %v573 = vpop.f32.mrf.mxu0
        %v574 = vpop.f32.mrf.mxu0
        %v575 = vadd.f32 %v320, %v574
        %v576 = vpop.f32.mrf.mxu0
        %577 = vmatprep.mubr.bf16.mxu0 0
        %578 = vmatmul.mubr.bf16.gmra.mxu0 %v443
        %v579 = vpop.f32.mrf.mxu0
        %v580 = vadd.f32 %v320, %v579
        %v581 = vpop.f32.mrf.mxu0
        %v582 = vpop.f32.mrf.mxu0
        %v583 = vadd.f32 %v320, %v582
        %v584 = vpop.f32.mrf.mxu0
        %585 = vmatprep.mubr.bf16.mxu0 0
        %586 = vmatmul.mubr.bf16.gmra.mxu0 %v446
        %v587 = vpop.f32.mrf.mxu0
        %v588 = vadd.f32 %v320, %v587
        %v589 = vpop.f32.mrf.mxu0
        %v590 = vpop.f32.mrf.mxu0
        %v591 = vadd.f32 %v320, %v590
        %v592 = vpop.f32.mrf.mxu0
        %593 = vmatprep.mubr.bf16.mxu0 0
        %594 = vmatmul.mubr.bf16.gmra.mxu0 %v449
        %v595 = vpop.f32.mrf.mxu0
        %v596 = vadd.f32 %v320, %v595
        %v597 = vpop.f32.mrf.mxu0
        %v598 = vpop.f32.mrf.mxu0
        %v599 = vadd.f32 %v320, %v598
        %v600 = vpop.f32.mrf.mxu0
        %601 = vmatprep.mubr.bf16.mxu0 0
        %602 = vmatmul.mubr.bf16.gmra.mxu0 %v452
        %v603 = vpop.f32.mrf.mxu0
        %v604 = vadd.f32 %v320, %v603
        %v605 = vpop.f32.mrf.mxu0
        %v606 = vpop.f32.mrf.mxu0
        %v607 = vadd.f32 %v320, %v606
        %v608 = vpop.f32.mrf.mxu0
        %609 = vmatprep.mubr.bf16.mxu0 0
        %610 = vmatmul.mubr.bf16.gmra.mxu0 %v455
        %v611 = vpop.f32.mrf.mxu0
        %v612 = vadd.f32 %v320, %v611
        %v613 = vpop.f32.mrf.mxu0
        %v614 = vpop.f32.mrf.mxu0
        %v615 = vadd.f32 %v320, %v614
        %v616 = vpop.f32.mrf.mxu0
        %617 = vdwg.mxu0
        %v618 = vmax.f32 %v492, 0.0
        %v619 = vmax.f32 %v495, 0.0
        %v620 = vmax.f32 %v500, 0.0
        %v621 = vmax.f32 %v503, 0.0
        %v622 = vmax.f32 %v508, 0.0
        %v623 = vmax.f32 %v511, 0.0
        %v624 = vmax.f32 %v516, 0.0
        %v625 = vmax.f32 %v519, 0.0
        %v626 = vmax.f32 %v524, 0.0
        %v627 = vmax.f32 %v527, 0.0
        %v628 = vmax.f32 %v532, 0.0
        %v629 = vmax.f32 %v535, 0.0
        %v630 = vmax.f32 %v540, 0.0
        %v631 = vmax.f32 %v543, 0.0
        %v632 = vmax.f32 %v548, 0.0
        %v633 = vmax.f32 %v551, 0.0
        %v634 = vmax.f32 %v556, 0.0
        %v635 = vmax.f32 %v559, 0.0
        %v636 = vmax.f32 %v564, 0.0
        %v637 = vmax.f32 %v567, 0.0
        %v638 = vmax.f32 %v572, 0.0
        %v639 = vmax.f32 %v575, 0.0
        %v640 = vmax.f32 %v580, 0.0
        %v641 = vmax.f32 %v583, 0.0
        %v642 = vmax.f32 %v588, 0.0
        %v643 = vmax.f32 %v591, 0.0
        %v644 = vmax.f32 %v596, 0.0
        %v645 = vmax.f32 %v599, 0.0
        %v646 = vmax.f32 %v604, 0.0
        %v647 = vmax.f32 %v607, 0.0
        %v648 = vmax.f32 %v612, 0.0
        %v649 = vmax.f32 %v615, 0.0
        %v650 = vpack.c.bf16 %v619, %v618
        %v651 = vpack.c.bf16 %v621, %v620
        %v652 = vpack.c.bf16 %v623, %v622
        %v653 = vpack.c.bf16 %v625, %v624
        %v654 = vpack.c.bf16 %v627, %v626
        %v655 = vpack.c.bf16 %v629, %v628
        %v656 = vpack.c.bf16 %v631, %v630
        %v657 = vpack.c.bf16 %v633, %v632
        %v658 = vpack.c.bf16 %v635, %v634
        %v659 = vpack.c.bf16 %v637, %v636
        %v660 = vpack.c.bf16 %v639, %v638
        %v661 = vpack.c.bf16 %v641, %v640
        %v662 = vpack.c.bf16 %v643, %v642
        %v663 = vpack.c.bf16 %v645, %v644
        %v664 = vpack.c.bf16 %v647, %v646
        %v665 = vpack.c.bf16 %v649, %v648
        %v666 = vld [vmem:[%s3] sm:$0xf]
        %v667 = vld [vmem:[%s3 + $0x4] sm:$0xf]
        %v668 = vld [vmem:[%s3 + $0x8] sm:$0xf]
        %v669 = vld [vmem:[%s3 + $0xc] sm:$0xf]
        %v670 = vld [vmem:[%s3 + $0x10] sm:$0xf]
        %v671 = vld [vmem:[%s3 + $0x14] sm:$0xf]
        %v672 = vld [vmem:[%s3 + $0x18] sm:$0xf]
        %v673 = vld [vmem:[%s3 + $0x1c] sm:$0xf]
        %v674 = vld [vmem:[%s3 + $0x20] sm:$0xf]
        %v675 = vld [vmem:[%s3 + $0x24] sm:$0xf]
        %v676 = vld [vmem:[%s3 + $0x28] sm:$0xf]
        %v677 = vld [vmem:[%s3 + $0x2c] sm:$0xf]
        %v678 = vld [vmem:[%s3 + $0x30] sm:$0xf]
        %v679 = vld [vmem:[%s3 + $0x34] sm:$0xf]
        %v680 = vld [vmem:[%s3 + $0x38] sm:$0xf]
        %v681 = vld [vmem:[%s3 + $0x3c] sm:$0xf]
        %v682 = vld [vmem:[%s4] sm:$0x1]
        %v684 = vlaneseq
        %v685 = vshrl.u32 %v684, 7
        %v686 = vsub.s32 0, %v685
        %v687 = vrot.slane %v682, %v686
        %v705 = vunpack.c.l.b16 %v666
        %v706 = vunpack.c.l.b16 %v667
        %v707 = vunpack.c.l.b16 %v668
        %v708 = vunpack.c.l.b16 %v669
        %v709 = vunpack.c.l.b16 %v670
        %v710 = vunpack.c.l.b16 %v671
        %v711 = vunpack.c.l.b16 %v672
        %v712 = vunpack.c.l.b16 %v673
        %v713 = vunpack.c.l.b16 %v674
        %v714 = vunpack.c.l.b16 %v675
        %v715 = vunpack.c.l.b16 %v676
        %v716 = vunpack.c.l.b16 %v677
        %v717 = vunpack.c.l.b16 %v678
        %v718 = vunpack.c.l.b16 %v679
        %v719 = vunpack.c.l.b16 %v680
        %v720 = vunpack.c.l.b16 %v681
        %v721 = vpack.c.b16 %v706, %v705
        %v722 = vpack.c.b16 %v708, %v707
        %v723 = vpack.c.b16 %v710, %v709
        %v724 = vpack.c.b16 %v712, %v711
        %v725 = vpack.c.b16 %v714, %v713
        %v726 = vpack.c.b16 %v716, %v715
        %v727 = vpack.c.b16 %v718, %v717
        %v728 = vpack.c.b16 %v720, %v719
        %737 = vmatprep.subr.bf16.mxu0 0
        %738 = vmatpush1.bf16.msra.mxu0 %v728
        %739 = vmatprep.subr.bf16.mxu0 0
        %740 = vmatpush1.bf16.msra.mxu0 %v727
        %741 = vmatprep.subr.bf16.mxu0 0
        %742 = vmatpush1.bf16.msra.mxu0 %v726
        %743 = vmatprep.subr.bf16.mxu0 0
        %744 = vmatpush1.bf16.msra.mxu0 %v725
        %745 = vmatprep.subr.bf16.mxu0 0
        %746 = vmatpush1.bf16.msra.mxu0 %v724
        %747 = vmatprep.subr.bf16.mxu0 0
        %748 = vmatpush1.bf16.msra.mxu0 %v723
        %749 = vmatprep.subr.bf16.mxu0 0
        %750 = vmatpush1.bf16.msra.mxu0 %v722
        %751 = vmatprep.subr.bf16.mxu0 0
        %752 = vmatpush1.bf16.msra.mxu0 %v721
        %753 = vmatprep.subr.bf16.mxu0 0
        %754 = vmatpush2.bf16.msra.mxu0 0
        %755 = vmatprep.subr.bf16.mxu0 0
        %756 = vmatpush2.bf16.msra.mxu0 0
        %757 = vmatprep.subr.bf16.mxu0 0
        %758 = vmatpush2.bf16.msra.mxu0 0
        %759 = vmatprep.subr.bf16.mxu0 0
        %760 = vmatpush2.bf16.msra.mxu0 0
        %761 = vmatprep.subr.bf16.mxu0 0
        %762 = vmatpush2.bf16.msra.mxu0 0
        %763 = vmatprep.subr.bf16.mxu0 0
        %764 = vmatpush2.bf16.msra.mxu0 0
        %765 = vmatprep.subr.bf16.mxu0 0
        %766 = vmatpush2.bf16.msra.mxu0 0
        %767 = vmatprep.subr.bf16.mxu0 0
        %768 = vmatpush2.bf16.msra.mxu0 0
        %769 = vmatprep.mubr.bf16.mxu0 0
        %770 = vmatmul.mubr.bf16.gmra.mxu0 %v650
        %v771 = vpop.f32.mrf.mxu0
        %v772 = vadd.f32 %v687, %v771
        %v773 = vpop.f32.mrf.mxu0
        %v774 = vpop.f32.mrf.mxu0
        %v775 = vadd.f32 %v687, %v774
        %v776 = vpop.f32.mrf.mxu0
        %777 = vmatprep.mubr.bf16.mxu0 0
        %778 = vmatmul.mubr.bf16.gmra.mxu0 %v651
        %v779 = vpop.f32.mrf.mxu0
        %v780 = vadd.f32 %v687, %v779
        %v781 = vpop.f32.mrf.mxu0
        %v782 = vpop.f32.mrf.mxu0
        %v783 = vadd.f32 %v687, %v782
        %v784 = vpop.f32.mrf.mxu0
        %785 = vmatprep.mubr.bf16.mxu0 0
        %786 = vmatmul.mubr.bf16.gmra.mxu0 %v652
        %v787 = vpop.f32.mrf.mxu0
        %v788 = vadd.f32 %v687, %v787
        %v789 = vpop.f32.mrf.mxu0
        %v790 = vpop.f32.mrf.mxu0
        %v791 = vadd.f32 %v687, %v790
        %v792 = vpop.f32.mrf.mxu0
        %793 = vmatprep.mubr.bf16.mxu0 0
        %794 = vmatmul.mubr.bf16.gmra.mxu0 %v653
        %v795 = vpop.f32.mrf.mxu0
        %v796 = vadd.f32 %v687, %v795
        %v797 = vpop.f32.mrf.mxu0
        %v798 = vpop.f32.mrf.mxu0
        %v799 = vadd.f32 %v687, %v798
        %v800 = vpop.f32.mrf.mxu0
        %801 = vmatprep.mubr.bf16.mxu0 0
        %802 = vmatmul.mubr.bf16.gmra.mxu0 %v654
        %v803 = vpop.f32.mrf.mxu0
        %v804 = vadd.f32 %v687, %v803
        %v805 = vpop.f32.mrf.mxu0
        %v806 = vpop.f32.mrf.mxu0
        %v807 = vadd.f32 %v687, %v806
        %v808 = vpop.f32.mrf.mxu0
        %809 = vmatprep.mubr.bf16.mxu0 0
        %810 = vmatmul.mubr.bf16.gmra.mxu0 %v655
        %v811 = vpop.f32.mrf.mxu0
        %v812 = vadd.f32 %v687, %v811
        %v813 = vpop.f32.mrf.mxu0
        %v814 = vpop.f32.mrf.mxu0
        %v815 = vadd.f32 %v687, %v814
        %v816 = vpop.f32.mrf.mxu0
        %817 = vmatprep.mubr.bf16.mxu0 0
        %818 = vmatmul.mubr.bf16.gmra.mxu0 %v656
        %v819 = vpop.f32.mrf.mxu0
        %v820 = vadd.f32 %v687, %v819
        %v821 = vpop.f32.mrf.mxu0
        %v822 = vpop.f32.mrf.mxu0
        %v823 = vadd.f32 %v687, %v822
        %v824 = vpop.f32.mrf.mxu0
        %825 = vmatprep.mubr.bf16.mxu0 0
        %826 = vmatmul.mubr.bf16.gmra.mxu0 %v657
        %v827 = vpop.f32.mrf.mxu0
        %v828 = vadd.f32 %v687, %v827
        %v829 = vpop.f32.mrf.mxu0
        %v830 = vpop.f32.mrf.mxu0
        %v831 = vadd.f32 %v687, %v830
        %v832 = vpop.f32.mrf.mxu0
        %833 = vmatprep.mubr.bf16.mxu0 0
        %834 = vmatmul.mubr.bf16.gmra.mxu0 %v658
        %v835 = vpop.f32.mrf.mxu0
        %v836 = vadd.f32 %v687, %v835
        %v837 = vpop.f32.mrf.mxu0
        %v838 = vpop.f32.mrf.mxu0
        %v839 = vadd.f32 %v687, %v838
        %v840 = vpop.f32.mrf.mxu0
        %841 = vmatprep.mubr.bf16.mxu0 0
        %842 = vmatmul.mubr.bf16.gmra.mxu0 %v659
        %v843 = vpop.f32.mrf.mxu0
        %v844 = vadd.f32 %v687, %v843
        %v845 = vpop.f32.mrf.mxu0
        %v846 = vpop.f32.mrf.mxu0
        %v847 = vadd.f32 %v687, %v846
        %v848 = vpop.f32.mrf.mxu0
        %849 = vmatprep.mubr.bf16.mxu0 0
        %850 = vmatmul.mubr.bf16.gmra.mxu0 %v660
        %v851 = vpop.f32.mrf.mxu0
        %v852 = vadd.f32 %v687, %v851
        %v853 = vpop.f32.mrf.mxu0
        %v854 = vpop.f32.mrf.mxu0
        %v855 = vadd.f32 %v687, %v854
        %v856 = vpop.f32.mrf.mxu0
        %857 = vmatprep.mubr.bf16.mxu0 0
        %858 = vmatmul.mubr.bf16.gmra.mxu0 %v661
        %v859 = vpop.f32.mrf.mxu0
        %v860 = vadd.f32 %v687, %v859
        %v861 = vpop.f32.mrf.mxu0
        %v862 = vpop.f32.mrf.mxu0
        %v863 = vadd.f32 %v687, %v862
        %v864 = vpop.f32.mrf.mxu0
        %865 = vmatprep.mubr.bf16.mxu0 0
        %866 = vmatmul.mubr.bf16.gmra.mxu0 %v662
        %v867 = vpop.f32.mrf.mxu0
        %v868 = vadd.f32 %v687, %v867
        %v869 = vpop.f32.mrf.mxu0
        %v870 = vpop.f32.mrf.mxu0
        %v871 = vadd.f32 %v687, %v870
        %v872 = vpop.f32.mrf.mxu0
        %873 = vmatprep.mubr.bf16.mxu0 0
        %874 = vmatmul.mubr.bf16.gmra.mxu0 %v663
        %v875 = vpop.f32.mrf.mxu0
        %v876 = vadd.f32 %v687, %v875
        %v877 = vpop.f32.mrf.mxu0
        %v878 = vpop.f32.mrf.mxu0
        %v879 = vadd.f32 %v687, %v878
        %v880 = vpop.f32.mrf.mxu0
        %881 = vmatprep.mubr.bf16.mxu0 0
        %882 = vmatmul.mubr.bf16.gmra.mxu0 %v664
        %v883 = vpop.f32.mrf.mxu0
        %v884 = vadd.f32 %v687, %v883
        %v885 = vpop.f32.mrf.mxu0
        %v886 = vpop.f32.mrf.mxu0
        %v887 = vadd.f32 %v687, %v886
        %v888 = vpop.f32.mrf.mxu0
        %889 = vmatprep.mubr.bf16.mxu0 0
        %890 = vmatmul.mubr.bf16.gmra.mxu0 %v665
        %v891 = vpop.f32.mrf.mxu0
        %v892 = vadd.f32 %v687, %v891
        %v893 = vpop.f32.mrf.mxu0
        %v894 = vpop.f32.mrf.mxu0
        %v895 = vadd.f32 %v687, %v894
        %v896 = vpop.f32.mrf.mxu0
        %897 = vdwg.mxu0
        %v898 = vmax.f32 %v772, 0.0
        %v899 = vmax.f32 %v775, 0.0
        %v900 = vmax.f32 %v780, 0.0
        %v901 = vmax.f32 %v783, 0.0
        %v902 = vmax.f32 %v788, 0.0
        %v903 = vmax.f32 %v791, 0.0
        %v904 = vmax.f32 %v796, 0.0
        %v905 = vmax.f32 %v799, 0.0
        %v906 = vmax.f32 %v804, 0.0
        %v907 = vmax.f32 %v807, 0.0
        %v908 = vmax.f32 %v812, 0.0
        %v909 = vmax.f32 %v815, 0.0
        %v910 = vmax.f32 %v820, 0.0
        %v911 = vmax.f32 %v823, 0.0
        %v912 = vmax.f32 %v828, 0.0
        %v913 = vmax.f32 %v831, 0.0
        %v914 = vmax.f32 %v836, 0.0
        %v915 = vmax.f32 %v839, 0.0
        %v916 = vmax.f32 %v844, 0.0
        %v917 = vmax.f32 %v847, 0.0
        %v918 = vmax.f32 %v852, 0.0
        %v919 = vmax.f32 %v855, 0.0
        %v920 = vmax.f32 %v860, 0.0
        %v921 = vmax.f32 %v863, 0.0
        %v922 = vmax.f32 %v868, 0.0
        %v923 = vmax.f32 %v871, 0.0
        %v924 = vmax.f32 %v876, 0.0
        %v925 = vmax.f32 %v879, 0.0
        %v926 = vmax.f32 %v884, 0.0
        %v927 = vmax.f32 %v887, 0.0
        %v928 = vmax.f32 %v892, 0.0
        %v929 = vmax.f32 %v895, 0.0
        %v930 = vld [vmem:[%s5] sm:$0xf]
        %v931 = vpack.c.bf16 %v899, %v898
        %v932 = vpack.c.bf16 %v901, %v900
        %v933 = vpack.c.bf16 %v903, %v902
        %v934 = vpack.c.bf16 %v905, %v904
        %v935 = vpack.c.bf16 %v907, %v906
        %v936 = vpack.c.bf16 %v909, %v908
        %v937 = vpack.c.bf16 %v911, %v910
        %v938 = vpack.c.bf16 %v913, %v912
        %v939 = vpack.c.bf16 %v915, %v914
        %v940 = vpack.c.bf16 %v917, %v916
        %v941 = vpack.c.bf16 %v919, %v918
        %v942 = vpack.c.bf16 %v921, %v920
        %v943 = vpack.c.bf16 %v923, %v922
        %v944 = vpack.c.bf16 %v925, %v924
        %v945 = vpack.c.bf16 %v927, %v926
        %v946 = vpack.c.bf16 %v929, %v928
        %947 = vmatprep.subr.bf16.mxu0 0
        %948 = vmatpush1.bf16.xpose.msra.mxu0 %v938
        %949 = vmatprep.subr.bf16.mxu0 0
        %950 = vmatpush1.bf16.xpose.msra.mxu0 %v937
        %951 = vmatprep.subr.bf16.mxu0 0
        %952 = vmatpush1.bf16.xpose.msra.mxu0 %v936
        %953 = vmatprep.subr.bf16.mxu0 0
        %954 = vmatpush1.bf16.xpose.msra.mxu0 %v935
        %955 = vmatprep.subr.bf16.mxu0 0
        %956 = vmatpush1.bf16.xpose.msra.mxu0 %v934
        %957 = vmatprep.subr.bf16.mxu0 0
        %958 = vmatpush1.bf16.xpose.msra.mxu0 %v933
        %959 = vmatprep.subr.bf16.mxu0 0
        %960 = vmatpush1.bf16.xpose.msra.mxu0 %v932
        %961 = vmatprep.subr.bf16.mxu0 0
        %962 = vmatpush1.bf16.xpose.msra.mxu0 %v931
        %963 = vmatprep.subr.bf16.mxu0 0
        %964 = vmatpush2.bf16.xpose.msra.mxu0 %v946
        %965 = vmatprep.subr.bf16.mxu0 0
        %966 = vmatpush2.bf16.xpose.msra.mxu0 %v945
        %967 = vmatprep.subr.bf16.mxu0 0
        %968 = vmatpush2.bf16.xpose.msra.mxu0 %v944
        %969 = vmatprep.subr.bf16.mxu0 0
        %970 = vmatpush2.bf16.xpose.msra.mxu0 %v943
        %971 = vmatprep.subr.bf16.mxu0 0
        %972 = vmatpush2.bf16.xpose.msra.mxu0 %v942
        %973 = vmatprep.subr.bf16.mxu0 0
        %974 = vmatpush2.bf16.xpose.msra.mxu0 %v941
        %975 = vmatprep.subr.bf16.mxu0 0
        %976 = vmatpush2.bf16.xpose.msra.mxu0 %v940
        %977 = vmatprep.subr.bf16.mxu0 0
        %978 = vmatpush2.bf16.xpose.msra.mxu0 %v939
        %979 = vmatprep.mubr.bf16.mxu0 0
        %980 = vmatmul.mubr.bf16.gmra.mxu0 %v930
        %v981 = vpop.f32.mrf.mxu0
        %v982 = vadd.f32 0.0, %v981
        %v983 = vpop.f32.mrf.mxu0
        %v984 = vadd.f32 0.0, %v983
        %v985 = vpop.f32.mrf.mxu0
        %v986 = vpop.f32.mrf.mxu0
        %987 = vdwg.mxu0
        %s988 = sld [smem:[#allocation2]]
        %v989 = vstv %s988
        %v990 = vadd.f32 %v982, %v989
        %v991 = vadd.f32 %v984, %v989
        %v994 = vcombine.low %v990, %v991
        %v996 = vunpack.c.l.s4 1966171168
        %v997 = vunpack.c.0.s8 %v996
        %v998 = vlaneseq
        %v999 = vshrl.u32 %v998, 7
        %v1000 = vsub.s32 %v997, %v999
        %v1001 = vrot.slane %v994, %v1000
        %v1003 = vunpack.c.l.s4 1966171168
        %v1004 = vunpack.c.0.s8 %v1003
        %v1005 = vlaneseq
        %v1006 = vshrl.u32 %v1005, 7
        %v1007 = vsub.s32 %v1004, %v1006
        %v1008 = vrot.slane %v1001, %v1007
        %v1010 = vlaneseq
        %vm1011 = vcmp.ge.s32.totalorder %v1010, 0
        %vm1012 = vcmp.lt.s32.totalorder %v1010, 256
        %vm1013 = vmand %vm1011, %vm1012
        %1014 = vst.msk [vmem:[%s273] sm:$0x3] %vm1013, %v1008
        %s1015 = sand.u32 %s182, 1
        %s1016 = scalar_lea.sflag [#allocation4], %s1015
        %s1017 = sand.u32 %s182, 1
        %s1018 = smul.addr %s1017, 2
        %s1019 = scalar_lea.vmem [#allocation3], %s1018
        // Predicated region
        $region49: #{tpu_custom_call.1} parent=47 // pred_check
          %p1020 = pneg %p192
        $region50: #{tpu_custom_call.1} parent=47 // pred_check_branch
          %1022 = sbr.rel (%p1020) target = $region52
        $region51: #{tpu_custom_call.1} parent=47 // pred_region
          %s1024 = ssub.s32 32, 32
          %1025 = vsyncadd %s1016, %s1024
          %s1026 = smul.addr %s22, 2
          %s1027 = smul.addr %s1026, 16
          %s1028 = scalar_lea.hbm %s7, %s1027
          %s1030 = sshll.u32 %s1019, 4
          %s1031 = int_to_ptr.vmem [resolvable:$true] %s1030
          %1033 = dma.vmem_to_hbm [thread:$0]  %s1031, 32, %s1028, %s1016
        $region52: #{tpu_custom_call.1} parent=47 // pred_fallthru
          _
      $region48: #{tpu_custom_call.1} parent=5 // pred_fallthru
        _
      %p1034 = scmp.le.s32.totalorder 2, %s17
      // Predicated region
      $region53: #{tpu_custom_call.1} parent=5 // pred_check
        %p1035 = pneg %p1034
      $region54: #{tpu_custom_call.1} parent=5 // pred_check_branch
        %1037 = sbr.rel (%p1035) target = $region56
      $region55: #{tpu_custom_call.1} parent=5 // pred_region
        %s1038 = ssub.s32 %s17, 2
        // Predicated region
        $region57: #{tpu_custom_call.1} parent=55 // pred_check
          %p1039 = pneg %p198
        $region58: #{tpu_custom_call.1} parent=55 // pred_check_branch
          %1041 = sbr.rel (%p1039) target = $region60
        $region59: #{tpu_custom_call.1} parent=55 // pred_region
          %s1042 = sand.u32 %s183, 1
          %s1043 = scalar_lea.sflag [#allocation4], %s1042
          %s1044 = sand.u32 %s183, 1
          %s1045 = smul.addr %s1044, 2
          %s1046 = scalar_lea.vmem [#allocation3], %s1045
          %1047 = dma.done %s1043, 32
        $region60: #{tpu_custom_call.1} parent=55 // pred_fallthru
          _
      $region56: #{tpu_custom_call.1} parent=5 // pred_fallthru
        _
    $region6: #{tpu_custom_call.1} parent=1 // loop_footer
      %s21 = sadd.s32 1, %s17
    $region7: #{tpu_custom_call.1} parent=1 // loop_footer_branch
      %16 = sbr.rel target = $region3
    $region8: #{tpu_custom_call.1} parent=1 // loop_exit
      _
    %1048 = vsyncpa [#allocation4], 1
    %s1049 = scalar_lea.sflag [#allocation4], 1
    %1050 = vsyncpa %s1049, 1

</llo_original>
